<compile_context>
chip_gen: v7x
topology: tpu7x:2x2x1
jax: 0.10.0
libtpu: 0.0.40
codegen_flags: <defaults>
</compile_context>

<pallas_src>
import functools

import jax
import jax.numpy as jnp
from jax.experimental import pallas as pl
from jax.experimental.pallas import tpu as pltpu


def _round_up(x, m):
    return ((x + m - 1) // m) * m


# ----------------------------- fused Pallas kernel ------------------------- #
def _gcn_fused_kernel(a_hbm, h0_hbm, w_ref, b_ref, o_ref,
                      a_vmem, h_buf, sems, *, n_layers):
    """Grid = (layer,).  Shapes (padded):
         a_hbm  : (N, N)       bf16  normalized adjacency, left in HBM (pl.ANY)
         h0_hbm : (N, F)       bf16  input features, left in HBM (pl.ANY)
         w_ref  : (1, F, F)    bf16  this layer's weight
         b_ref  : (1, 1, F)    f32   this layer's bias
         o_ref  : (N, F)       f32   output (constant block -> written once)
         a_vmem : (N, N)       bf16  resident adjacency (loaded once at layer 0)
         h_buf  : (N, F)       bf16  resident activations (persist across layers)
         sems   : DMA sems (2,)      [0]=A copy, [1]=feature copy
    """
    layer = pl.program_id(0)
    is_last = layer == n_layers - 1

    a_copy = pltpu.make_async_copy(a_hbm, a_vmem, sems.at[0])
    h_copy = pltpu.make_async_copy(h0_hbm, h_buf, sems.at[1])

    # Load the graph and the input features exactly once.  The A_hat DMA is left
    # in flight while the first feature transform runs on the MXU.
    @pl.when(layer == 0)
    def _load_inputs():
        a_copy.start()
        h_copy.start()
        h_copy.wait()

    # Feature transform H @ W_l : bf16 x bf16 on the MXU, f32 accumulation.
    hw = jnp.dot(h_buf[...], w_ref[0], preferred_element_type=jnp.float32)

    @pl.when(layer == 0)
    def _wait_graph():
        a_copy.wait()

    # Neighborhood aggregation A_hat @ (H W_l) : bf16 MXU, f32 accumulation.
    agg = jnp.dot(a_vmem[...], hw.astype(jnp.bfloat16),
                  preferred_element_type=jnp.float32)
    out = agg + b_ref[0]                                   # (N, F) + (1, F), f32

    # Non-final layers: ReLU and stash activations for the next layer.
    # (Padded rows only ever accumulate relu(bias); padded A columns are zero so
    #  real rows stay exact.)
    @pl.when(layer < n_layers - 1)
    def _store_activations():
        h_buf[...] = jnp.maximum(out, 0.0).astype(h_buf.dtype)

    # Final layer: no activation, single HBM writeback (constant output block).
    @pl.when(is_last)
    def _write_output():
        o_ref[...] = out.astype(o_ref.dtype)


# ------------------------------ GCN forward -------------------------------- #
def _pack_params(params, f_pad):
    """Zero-pad every layer's (W, b) to (F_pad, F_pad) / (1, F_pad) and stack."""
    n_layers = len(params)
    w_all = jnp.zeros((n_layers, f_pad, f_pad), jnp.float32)
    b_all = jnp.zeros((n_layers, 1, f_pad), jnp.float32)
    for l, (w, b) in enumerate(params):
        f_in, f_out = w.shape
        w_all = w_all.at[l, :f_in, :f_out].set(w)
        b_all = b_all.at[l, 0, :f_out].set(b.reshape(-1))
    return w_all.astype(jnp.bfloat16), b_all


def _pick_vmem_limit(bytes_needed):
    """Scoped-VMEM request with headroom; never ask for the full physical VMEM."""
    phys = 64 * 1024 * 1024                       # assume the tightest chip (v7x)
    try:
        info = pltpu.get_tpu_info()
        phys = int(getattr(info, "vmem_capacity_bytes", phys))
    except Exception:
        pass
    cap = (phys * 7) // 8                         # leave ~12.5% for internal scratch
    want = max(bytes_needed * 3 // 2, 32 * 1024 * 1024)
    return int(min(want, cap))


def gcn_forward(a_hat, features, params):
    """Run the whole GraphConv stack inside one fused Pallas kernel."""
    n = a_hat.shape[0]
    in_feats = features.shape[1]
    n_outs = params[-1][0].shape[1]
    n_layers = len(params)

    # Lane-dense feature width; node count padded to a full lane tile so both
    # dims of A_hat (and the K dim of the aggregation matmul) stay unmasked.
    f_pad = _round_up(max([in_feats] + [w.shape[1] for w, _ in params]), 128)
    n_pad = _round_up(n, 128)

    # Zero-pad inputs (padded src columns are zero => real rows stay exact).
    a_p = jnp.zeros((n_pad, n_pad), jnp.bfloat16)
    a_p = a_p.at[:n, :n].set(a_hat.astype(jnp.bfloat16))
    h_p = jnp.zeros((n_pad, f_pad), jnp.bfloat16)
    h_p = h_p.at[:n, :in_feats].set(features.astype(jnp.bfloat16))
    w_all, b_all = _pack_params(params, f_pad)

    kernel = functools.partial(_gcn_fused_kernel, n_layers=n_layers)

    # Resident VMEM footprint (A + H + double-buffered W/b + output block).
    vmem_bytes = (n_pad * n_pad * 2 + n_pad * f_pad * 2
                  + 2 * f_pad * f_pad * 2 + 2 * f_pad * 4
                  + 2 * n_pad * f_pad * 4)

    flops = n_layers * (2 * n_pad * f_pad * f_pad + 2 * n_pad * n_pad * f_pad)
    bytes_accessed = (n_pad * n_pad * 2                      # A_hat, once
                      + n_pad * f_pad * 2                    # features, once
                      + n_layers * (f_pad * f_pad * 2 + f_pad * 4)   # W_l, b_l
                      + n_pad * f_pad * 4)                   # output, once

    out_padded = pl.pallas_call(
        kernel,
        out_shape=jax.ShapeDtypeStruct((n_pad, f_pad), jnp.float32),
        grid_spec=pltpu.PrefetchScalarGridSpec(
            num_scalar_prefetch=0,
            grid=(n_layers,),
            in_specs=[
                pl.BlockSpec(memory_space=pl.ANY),                      # A_hat (HBM)
                pl.BlockSpec(memory_space=pl.ANY),                      # features (HBM)
                pl.BlockSpec((1, f_pad, f_pad), lambda l: (l, 0, 0)),   # W_l
                pl.BlockSpec((1, 1, f_pad), lambda l: (l, 0, 0)),       # b_l
            ],
            out_specs=pl.BlockSpec((n_pad, f_pad), lambda l: (0, 0)),   # written once
            scratch_shapes=[
                pltpu.VMEM((n_pad, n_pad), jnp.bfloat16),   # resident A_hat
                pltpu.VMEM((n_pad, f_pad), jnp.bfloat16),   # resident H
                pltpu.SemaphoreType.DMA((2,)),              # A copy / feature copy
            ],
        ),
        compiler_params=pltpu.CompilerParams(
            dimension_semantics=("arbitrary",),             # layer axis is carried
            vmem_limit_bytes=_pick_vmem_limit(vmem_bytes),
        ),
        cost_estimate=pl.CostEstimate(
            flops=flops, transcendentals=0, bytes_accessed=bytes_accessed),
    )(a_p, h_p, w_all, b_all)

    return out_padded[:n, :n_outs]


# -------------------------- plain-JAX reference ----------------------------- #
def gcn_reference(a_hat, features, params):
    h = features
    for i, (w, b) in enumerate(params):
        h = a_hat @ (h @ w) + b
        if i < len(params) - 1:
            h = jnp.maximum(h, 0.0)
    return h


# ------------------------- graph / parameter setup ------------------------- #
def build_normalized_adjacency(n_nodes):
    """Deterministic ring graph + self loops, DGL 'both' normalization."""
    idx = jnp.arange(n_nodes)
    adj = jnp.zeros((n_nodes, n_nodes), dtype=jnp.float32)
    adj = adj.at[idx, idx].set(1.0)                       # self loops
    adj = adj.at[(idx + 1) % n_nodes, idx].set(1.0)       # i -> i+1
    adj = adj.at[(idx - 1) % n_nodes, idx].set(1.0)       # i -> i-1
    in_deg = adj.sum(axis=1)
    out_deg = adj.sum(axis=0)
    d_in = 1.0 / jnp.sqrt(jnp.clip(in_deg, 1.0))
    d_out = 1.0 / jnp.sqrt(jnp.clip(out_deg, 1.0))
    return d_in[:, None] * adj * d_out[None, :]


def init_params(key, in_feats, n_hidden, n_outs, n_layers):
    """Glorot-uniform weights, zero biases (DGL GraphConv init)."""
    dims = [in_feats] + [n_hidden] * n_layers + [n_outs]
    params = []
    for f_in, f_out in zip(dims[:-1], dims[1:]):
        key, wk = jax.random.split(key)
        limit = (6.0 / (f_in + f_out)) ** 0.5
        w = jax.random.uniform(wk, (f_in, f_out), jnp.float32, -limit, limit)
        b = jnp.zeros((1, f_out), dtype=jnp.float32)
        params.append((w, b))
    return params


# ---------------------------------- main ----------------------------------- #
if __name__ == "__main__":
    N_NODES = 16
    IN_FEATS = 8
    N_HIDDEN = 32
    N_OUTS = 4
    N_LAYERS = 2  # total GraphConv layers = N_LAYERS + 1 = 3

    key = jax.random.PRNGKey(0)
    key, fk = jax.random.split(key)
    features = jax.random.normal(fk, (N_NODES, IN_FEATS), dtype=jnp.float32)

    a_hat = build_normalized_adjacency(N_NODES)
    params = init_params(key, IN_FEATS, N_HIDDEN, N_OUTS, N_LAYERS)

    out = gcn_forward(a_hat, features, params)
    out = jax.block_until_ready(out)

    assert out.shape == (N_NODES, N_OUTS), out.shape
    assert out.dtype == jnp.float32, out.dtype

    ref = gcn_reference(a_hat, features, params)
    max_err = float(jnp.max(jnp.abs(out - ref)))
    assert jnp.allclose(out, ref, rtol=5e-2, atol=5e-2), max_err

    print("KERNEL_OK")
</pallas_src>

<mosaic_0001>
module attributes {stable_mosaic.version = 11 : i64} {
  func.func @_gcn_fused_kernel(%arg0: i32, %arg1: memref<128x128xbf16, #tpu.memory_space<any>>, %arg2: memref<128x128xbf16, #tpu.memory_space<any>>, %arg3: memref<1x128x128xbf16, #tpu.memory_space<vmem>>, %arg4: memref<1x1x128xf32, #tpu.memory_space<vmem>>, %arg5: memref<128x128xf32, #tpu.memory_space<vmem>>, %arg6: memref<128x128xbf16, #tpu.memory_space<vmem>>, %arg7: memref<128x128xbf16, #tpu.memory_space<vmem>>, %arg8: memref<2x!tpu.dma_semaphore, #tpu.memory_space<semaphore_mem>>) attributes {dimension_semantics = [#tpu.dimension_semantics<arbitrary>], iteration_bounds = array<i64: 3>, scalar_prefetch = 0 : i64, scratch_operands = 3 : i64, tpu.core_type = #tpu.core_type<tc>, window_params = [{}, {}, {transform_indices = @transform_2, window_bounds = array<i64: 1, 128, 128>}, {transform_indices = @transform_3, window_bounds = array<i64: 1, 1, 128>}, {pipeline_mode = #tpu.pipeline_mode<synchronous>, transform_indices = @transform_4, window_bounds = array<i64: 128, 128>}]} {
    %c2_i32 = arith.constant 2 : i32
    %0 = arith.cmpi eq, %arg0, %c2_i32 : i32
    %c0_i32 = arith.constant 0 : i32
    %1 = arith.cmpi eq, %arg0, %c0_i32 : i32
    %2 = arith.extui %1 : i1 to i32
    %c0_i32_0 = arith.constant 0 : i32
    %c1_i32 = arith.constant 1 : i32
    %c0_i32_1 = arith.constant 0 : i32
    %3 = arith.cmpi ne, %2, %c0_i32_1 : i32
    scf.if %3 {
      %23 = tpu.memref_slice %arg8[%c0_i32_0] : memref<2x!tpu.dma_semaphore, #tpu.memory_space<semaphore_mem>> -> memref<1x!tpu.dma_semaphore, #tpu.memory_space<semaphore_mem>>
      %24 = tpu.memref_squeeze %23 : memref<1x!tpu.dma_semaphore, #tpu.memory_space<semaphore_mem>> -> memref<!tpu.dma_semaphore, #tpu.memory_space<semaphore_mem>>
      tpu.enqueue_dma source(%arg1 : memref<128x128xbf16, #tpu.memory_space<any>>) target(%arg6 : memref<128x128xbf16, #tpu.memory_space<vmem>>) target_semaphore(%24 : memref<!tpu.dma_semaphore, #tpu.memory_space<semaphore_mem>>)
      %25 = tpu.memref_slice %arg8[%c1_i32] : memref<2x!tpu.dma_semaphore, #tpu.memory_space<semaphore_mem>> -> memref<1x!tpu.dma_semaphore, #tpu.memory_space<semaphore_mem>>
      %26 = tpu.memref_squeeze %25 : memref<1x!tpu.dma_semaphore, #tpu.memory_space<semaphore_mem>> -> memref<!tpu.dma_semaphore, #tpu.memory_space<semaphore_mem>>
      tpu.enqueue_dma source(%arg2 : memref<128x128xbf16, #tpu.memory_space<any>>) target(%arg7 : memref<128x128xbf16, #tpu.memory_space<vmem>>) target_semaphore(%26 : memref<!tpu.dma_semaphore, #tpu.memory_space<semaphore_mem>>)
      %27 = tpu.memref_slice %arg8[%c1_i32] : memref<2x!tpu.dma_semaphore, #tpu.memory_space<semaphore_mem>> -> memref<1x!tpu.dma_semaphore, #tpu.memory_space<semaphore_mem>>
      %28 = tpu.memref_squeeze %27 : memref<1x!tpu.dma_semaphore, #tpu.memory_space<semaphore_mem>> -> memref<!tpu.dma_semaphore, #tpu.memory_space<semaphore_mem>>
      tpu.wait_dma2 semaphore(%28 : memref<!tpu.dma_semaphore, #tpu.memory_space<semaphore_mem>>) src(%arg2 : memref<128x128xbf16, #tpu.memory_space<any>>) dst(%arg7 : memref<128x128xbf16, #tpu.memory_space<vmem>>)
    } else {
    }
    %c0 = arith.constant 0 : index
    %c0_2 = arith.constant 0 : index
    %4 = vector.load %arg7[%c0, %c0_2] : memref<128x128xbf16, #tpu.memory_space<vmem>>, vector<128x128xbf16>
    %c0_3 = arith.constant 0 : index
    %c0_4 = arith.constant 0 : index
    %c0_5 = arith.constant 0 : index
    %5 = vector.load %arg3[%c0_3, %c0_4, %c0_5] : memref<1x128x128xbf16, #tpu.memory_space<vmem>>, vector<1x128x128xbf16>
    %6 = vector.shape_cast %5 : vector<1x128x128xbf16> to vector<128x128xbf16>
    %cst = arith.constant dense<0.000000e+00> : vector<128x128xf32>
    %7 = tpu.matmul %4, %6, %cst {dimension_numbers = #tpu.dot_dimension_numbers<[1], [0], [0], [1], [0, 0, 1, 1], [], []>} : vector<128x128xbf16>, vector<128x128xbf16>, vector<128x128xf32> -> vector<128x128xf32>
    %c0_i32_6 = arith.constant 0 : i32
    %8 = arith.cmpi eq, %arg0, %c0_i32_6 : i32
    %9 = arith.extui %8 : i1 to i32
    %c0_i32_7 = arith.constant 0 : i32
    %c0_i32_8 = arith.constant 0 : i32
    %10 = arith.cmpi ne, %9, %c0_i32_8 : i32
    scf.if %10 {
      %23 = tpu.memref_slice %arg8[%c0_i32_7] : memref<2x!tpu.dma_semaphore, #tpu.memory_space<semaphore_mem>> -> memref<1x!tpu.dma_semaphore, #tpu.memory_space<semaphore_mem>>
      %24 = tpu.memref_squeeze %23 : memref<1x!tpu.dma_semaphore, #tpu.memory_space<semaphore_mem>> -> memref<!tpu.dma_semaphore, #tpu.memory_space<semaphore_mem>>
      tpu.wait_dma2 semaphore(%24 : memref<!tpu.dma_semaphore, #tpu.memory_space<semaphore_mem>>) src(%arg1 : memref<128x128xbf16, #tpu.memory_space<any>>) dst(%arg6 : memref<128x128xbf16, #tpu.memory_space<vmem>>)
    } else {
    }
    %c0_9 = arith.constant 0 : index
    %c0_10 = arith.constant 0 : index
    %11 = vector.load %arg6[%c0_9, %c0_10] : memref<128x128xbf16, #tpu.memory_space<vmem>>, vector<128x128xbf16>
    %12 = arith.truncf %7 : vector<128x128xf32> to vector<128x128xbf16>
    %cst_11 = arith.constant dense<0.000000e+00> : vector<128x128xf32>
    %13 = tpu.matmul %11, %12, %cst_11 {dimension_numbers = #tpu.dot_dimension_numbers<[1], [0], [0], [1], [0, 0, 1, 1], [], []>} : vector<128x128xbf16>, vector<128x128xbf16>, vector<128x128xf32> -> vector<128x128xf32>
    %c0_12 = arith.constant 0 : index
    %c0_13 = arith.constant 0 : index
    %c0_14 = arith.constant 0 : index
    %14 = vector.load %arg4[%c0_12, %c0_13, %c0_14] : memref<1x1x128xf32, #tpu.memory_space<vmem>>, vector<1x1x128xf32>
    %15 = vector.shape_cast %14 : vector<1x1x128xf32> to vector<1x128xf32>
    %16 = vector.broadcast %15 : vector<1x128xf32> to vector<128x128xf32>
    %17 = arith.addf %13, %16 : vector<128x128xf32>
    %c2_i32_15 = arith.constant 2 : i32
    %18 = arith.cmpi slt, %arg0, %c2_i32_15 : i32
    %19 = arith.extui %18 : i1 to i32
    %c0_i32_16 = arith.constant 0 : i32
    %20 = arith.cmpi ne, %19, %c0_i32_16 : i32
    scf.if %20 {
      %cst_18 = arith.constant 0.000000e+00 : f32
      %23 = vector.broadcast %cst_18 : f32 to vector<128x128xf32>
      %24 = arith.maximumf %17, %23 : vector<128x128xf32>
      %25 = arith.truncf %24 : vector<128x128xf32> to vector<128x128xbf16>
      %c0_19 = arith.constant 0 : index
      %c0_20 = arith.constant 0 : index
      %26 = vector.load %arg7[%c0_19, %c0_20] : memref<128x128xbf16, #tpu.memory_space<vmem>>, vector<128x128xbf16>
      tpu.vector_store %arg7[%c0_19, %c0_20], %25 {strides = array<i32>} : memref<128x128xbf16, #tpu.memory_space<vmem>>, vector<128x128xbf16>,
    } else {
    }
    %21 = arith.extui %0 : i1 to i32
    %c0_i32_17 = arith.constant 0 : i32
    %22 = arith.cmpi ne, %21, %c0_i32_17 : i32
    scf.if %22 {
      %c0_18 = arith.constant 0 : index
      %c0_19 = arith.constant 0 : index
      %23 = vector.load %arg5[%c0_18, %c0_19] : memref<128x128xf32, #tpu.memory_space<vmem>>, vector<128x128xf32>
      tpu.vector_store %arg5[%c0_18, %c0_19], %17 {strides = array<i32>} : memref<128x128xf32, #tpu.memory_space<vmem>>, vector<128x128xf32>,
    } else {
    }
    return
  }
  func.func @transform_2(%arg0: i32) -> (i32, i32, i32) {
    %c0_i32 = arith.constant 0 : i32
    %c0_i32_0 = arith.constant 0 : i32
    %c0_i32_1 = arith.constant 0 : i32
    return %arg0, %c0_i32, %c0_i32_0 : i32, i32, i32
  }
  func.func @transform_3(%arg0: i32) -> (i32, i32, i32) {
    %c0_i32 = arith.constant 0 : i32
    %c0_i32_0 = arith.constant 0 : i32
    %c0_i32_1 = arith.constant 0 : i32
    return %arg0, %c0_i32, %c0_i32_0 : i32, i32, i32
  }
  func.func @transform_4(%arg0: i32) -> (i32, i32) {
    %c0_i32 = arith.constant 0 : i32
    %c0_i32_0 = arith.constant 0 : i32
    %c0_i32_1 = arith.constant 0 : i32
    return %c0_i32, %c0_i32_0 : i32, i32
  }
}

</mosaic_0001>

<llo_original>
// kernel: tpu_custom_call.1
$region0: #{tpu_custom_call.1}
  #allocation0 [shape = 'u32[]', space=smem, size = 0x4, offset = 0x4, fixed_abs, tag = 'smem constant byte address 0x4 - core index']
  #allocation1 [shape = 'u32[144,128]{1,0:T(1,128)}', space=vmem, size = 0x12000, scoped, tag = 'internal scratch']
  #allocation2 [shape = 'bf16[128,128]{1,0:T(16,128)(2,1)}', space=vmem, size = 0x8000, scoped, tag = 'scratch operand']
  #allocation3 [shape = 'bf16[128,128]{1,0:T(16,128)(2,1)}', space=vmem, size = 0x8000, scoped, tag = 'scratch operand']
  #allocation4 [shape = 's32[2]{0}', space=sflag, size = 0x8, scoped, tag = 'scratch operand']
  #allocation9 [shape = 's32[]', space=sflag, size = 0x4, offset = 0, fixed_abs, tag = 'sflag constant byte address 0x0 - dummy sync flag']
  #allocation10 [shape = 's32[]', space=sflag, size = 0x4, offset = 0, fixed_abs, tag = 'sflag constant byte address 0x0 - dummy sync flag']
  #allocation11 [shape = 'u32[]', space=smem, size = 0x4, offset = 0x44, fixed_abs, tag = 'smem constant byte address 0x44 - assertion arg 0']
  #allocation12 [shape = 'u32[]', space=smem, size = 0x4, offset = 0x48, fixed_abs, tag = 'smem constant byte address 0x48 - assertion arg 1']
  #allocation13 [shape = 's32[]', space=sflag, size = 0x4, offset = 0, fixed_abs, tag = 'sflag constant byte address 0x0 - dummy sync flag']
  #allocation14 [shape = 's32[]', space=sflag, size = 0x4, offset = 0, fixed_abs, tag = 'sflag constant byte address 0x0 - dummy sync flag']
  %s0 = inlined_call_operand.hbm [shape: bf16[128,128], index: 0, kind: input, shape index: {}]
  %s1 = inlined_call_operand.hbm [shape: bf16[128,128], index: 1, kind: input, shape index: {}]
  %s2 = inlined_call_operand.hbm [shape: bf16[3,128,128], index: 2, kind: input, shape index: {}]
  %s3 = inlined_call_operand.vmem [shape: f32[3,1,128], index: 3, kind: input, shape index: {}]
  %s4 = inlined_call_operand.hbm [shape: f32[128,128], index: 4, kind: output, shape index: {}]
  %s5 = sld [smem:[#allocation0]]
  $region69: #{tpu_custom_call.1} parent=0
    _
  %s7 = ssub.s32 1, %s5
  %s8 = scalar_select 0, %s7, %s5
  $region1: #{tpu_custom_call.1} parent=0
    #allocation5 [shape = 'u8[65536]{0}', space=vmem, size = 0x10000, scoped, tag = 'input window, operand 2']
    #allocation6 [shape = 's32[2]{0}', space=sflag, size = 0x8, scoped, tag = 'scoped memory for tpu_custom_call.1']
    #allocation7 [shape = 's32[2]{0}', space=sflag, size = 0x8, scoped, tag = 'scoped memory for tpu_custom_call.1']
    #allocation8 [shape = 'u8[65536]{0}', space=vmem, size = 0x10000, scoped, tag = 'output window, operand 0, single buffered']
    %9 = vsyncpa [#allocation6], 0
    %s10 = scalar_lea.sflag [#allocation6], 1
    %11 = vsyncpa %s10, 0
    %12 = vsyncpa [#allocation7], 0
    loop: start=0, step=1, limit=5
    $region2: #{tpu_custom_call.1} parent=1 // loop_pre_header
      _
    $region3: #{tpu_custom_call.1} parent=1 // loop_header
      %s14 = sphi 0, %s18
      %p15 = scmp.ge.s32.totalorder %s14, 5
      %s24 = sphi 0, %s26
      %s27 = sphi 0, %s24
      %s28 = sphi 0, %s27
      %s44 = sphi 0, %s28
      %s50 = sphi 0, %s52
      %s53 = sphi 0, %s50
      %s54 = sphi 0, %s53
      %s70 = sphi 0, %s54
      %s74 = sphi 0, %s74
      %s76 = sphi 0, %s74
      %s77 = sphi 0, %s76
      %s91 = sphi 0, %s77
    $region4: #{tpu_custom_call.1} parent=1 // loop_header_branch
      %17 = sbr.rel (%p15) target = $region8
    $region5: #{tpu_custom_call.1} parent=1 // loop_body
      %s19 = ssub.s32 %s14, 1
      %s20 = ssub.s32 %s14, 2
      %s21 = sadd.s32 %s14, 1
      %s22 = ssub.s32 %s14, %s21
      %p23 = scmp.eq.s32.totalorder %s22, 0
      %s25 = sadd.s32 %s24, 1
      %s26 = scalar_select %p23, %s24, %s25
      %p29 = pneg %p23
      %p30 = scmp.eq.s32.totalorder %s14, 2
      %p31 = por %p29, %p30
      %p32 = scmp.ne.s32.totalorder %s24, %s27
      %p33 = scmp.eq.s32.totalorder %s14, 0
      %p34 = por %p32, %p33
      %p35 = scmp.ne.s32.totalorder %s24, %s27
      %p36 = scmp.eq.s32.totalorder %s19, 2
      %p37 = por %p35, %p36
      %p38 = scmp.ne.s32.totalorder %s27, %s28
      %p39 = scmp.eq.s32.totalorder %s19, 0
      %p40 = por %p38, %p39
      %p41 = scmp.ne.s32.totalorder %s27, %s28
      %p42 = scmp.eq.s32.totalorder %s20, 2
      %p43 = por %p41, %p42
      %p45 = scmp.ne.s32.totalorder %s28, %s44
      %p46 = scmp.eq.s32.totalorder %s20, 0
      %p47 = por %p45, %p46
      %s48 = ssub.s32 %s14, %s21
      %p49 = scmp.eq.s32.totalorder %s48, 0
      %s51 = sadd.s32 %s50, 1
      %s52 = scalar_select %p49, %s50, %s51
      %p55 = pneg %p49
      %p56 = scmp.eq.s32.totalorder %s14, 2
      %p57 = por %p55, %p56
      %p58 = scmp.ne.s32.totalorder %s50, %s53
      %p59 = scmp.eq.s32.totalorder %s14, 0
      %p60 = por %p58, %p59
      %p61 = scmp.ne.s32.totalorder %s50, %s53
      %p62 = scmp.eq.s32.totalorder %s19, 2
      %p63 = por %p61, %p62
      %p64 = scmp.ne.s32.totalorder %s53, %s54
      %p65 = scmp.eq.s32.totalorder %s19, 0
      %p66 = por %p64, %p65
      %p67 = scmp.ne.s32.totalorder %s53, %s54
      %p68 = scmp.eq.s32.totalorder %s20, 2
      %p69 = por %p67, %p68
      %p71 = scmp.ne.s32.totalorder %s54, %s70
      %p72 = scmp.eq.s32.totalorder %s20, 0
      %p73 = por %p71, %p72
      %s75 = sadd.s32 %s74, 1
      %p78 = scmp.eq.s32.totalorder %s14, 2
      %p79 = scmp.ne.s32.totalorder %s74, %s76
      %p80 = scmp.eq.s32.totalorder %s14, 0
      %p81 = por %p79, %p80
      %p82 = scmp.ne.s32.totalorder %s74, %s76
      %p83 = scmp.eq.s32.totalorder %s19, 2
      %p84 = por %p82, %p83
      %p85 = scmp.ne.s32.totalorder %s76, %s77
      %p86 = scmp.eq.s32.totalorder %s19, 0
      %p87 = por %p85, %p86
      %p88 = scmp.ne.s32.totalorder %s76, %s77
      %p89 = scmp.eq.s32.totalorder %s20, 2
      %p90 = por %p88, %p89
      %p92 = scmp.ne.s32.totalorder %s77, %s91
      %p93 = scmp.eq.s32.totalorder %s20, 0
      %p94 = por %p92, %p93
      %p95 = scmp.le.s32.totalorder 1, %s14
      %p96 = scmp.lt.s32.totalorder %s14, 4
      %p97 = pnand %p95, %p96
      %p98 = pneg %p97
      // Predicated region
      $region9: #{tpu_custom_call.1} parent=5 // pred_check
        _
      $region10: #{tpu_custom_call.1} parent=5 // pred_check_branch
        %100 = sbr.rel (%p97) target = $region12
      $region11: #{tpu_custom_call.1} parent=5 // pred_region
        %s101 = ssub.s32 %s14, 1
      $region12: #{tpu_custom_call.1} parent=5 // pred_fallthru
        _
      %p102 = scmp.lt.s32.totalorder %s14, 3
      // Predicated region
      $region13: #{tpu_custom_call.1} parent=5 // pred_check
        %p103 = pneg %p102
      $region14: #{tpu_custom_call.1} parent=5 // pred_check_branch
        %105 = sbr.rel (%p103) target = $region16
      $region15: #{tpu_custom_call.1} parent=5 // pred_region
        // Predicated region
        $region17: #{tpu_custom_call.1} parent=15 // pred_check
          %p106 = pneg %p34
        $region18: #{tpu_custom_call.1} parent=15 // pred_check_branch
          %108 = sbr.rel (%p106) target = $region20
        $region19: #{tpu_custom_call.1} parent=15 // pred_region
          %s109 = sand.u32 %s24, 1
          %s110 = scalar_lea.sflag [#allocation6], %s109
          %s111 = sand.u32 %s24, 1
          %s112 = smul.addr %s111, 64
          %s113 = scalar_lea.vmem [#allocation5], %s112
          %s115 = ssub.s32 1024, 1024
          %116 = vsyncadd %s110, %s115
          %s117 = smul.addr %s14, 16
          %s118 = smul.addr %s117, 64
          %s119 = scalar_lea.hbm %s2, %s118
          %s120 = sshll.u32 %s113, 4
          %s121 = int_to_ptr.vmem [resolvable:$true] %s120
          %126 = dma.hbm_to_vmem [thread:$0]  %s119, 1024, %s121, %s110, 64, 64, 4
        $region20: #{tpu_custom_call.1} parent=15 // pred_fallthru
          _
        // Predicated region
        $region21: #{tpu_custom_call.1} parent=15 // pred_check
          %p127 = pneg %p60
        $region22: #{tpu_custom_call.1} parent=15 // pred_check_branch
          %129 = sbr.rel (%p127) target = $region24
        $region23: #{tpu_custom_call.1} parent=15 // pred_region
          %p130 = scmp.lt.s32.totalorder %s14, 2
          %s131 = scalar_select %p130, %s14, 2
          %s132 = scalar_lea.vmem %s3, %s131
        $region24: #{tpu_custom_call.1} parent=15 // pred_fallthru
          _
      $region16: #{tpu_custom_call.1} parent=5 // pred_fallthru
        _
      %p133 = scmp.le.s32.totalorder 1, %s14
      %p134 = scmp.lt.s32.totalorder %s14, 4
      %p135 = pnand %p133, %p134
      %p136 = pneg %p135
      // Predicated region
      $region25: #{tpu_custom_call.1} parent=5 // pred_check
        _
      $region26: #{tpu_custom_call.1} parent=5 // pred_check_branch
        %138 = sbr.rel (%p135) target = $region28
      $region27: #{tpu_custom_call.1} parent=5 // pred_region
        %s139 = ssub.s32 %s14, 1
        %s140 = sand.u32 %s27, 1
        %s141 = scalar_lea.sflag [#allocation6], %s140
        %s142 = sand.u32 %s27, 1
        %s143 = smul.addr %s142, 64
        %s144 = scalar_lea.vmem [#allocation5], %s143
        // Predicated region
        $region29: #{tpu_custom_call.1} parent=27 // pred_check
          %p145 = pneg %p40
        $region30: #{tpu_custom_call.1} parent=27 // pred_check_branch
          %147 = sbr.rel (%p145) target = $region32
        $region31: #{tpu_custom_call.1} parent=27 // pred_region
          %148 = dma.done %s141, 1024
        $region32: #{tpu_custom_call.1} parent=27 // pred_fallthru
          _
        %s149 = sand.u32 %s27, 1
        %s150 = scalar_lea.sflag [#allocation6], %s149
        %s151 = sand.u32 %s27, 1
        %s152 = smul.addr %s151, 64
        %s153 = scalar_lea.vmem [#allocation5], %s152
        %p154 = pneg %p40
        %p155 = pneg %p37
        %p156 = scmp.lt.s32.totalorder %s19, 2
        %s157 = scalar_select %p156, %s19, 2
        %s158 = scalar_lea.vmem %s3, %s157
        %p159 = pneg %p66
        %p160 = pneg %p63
        %p161 = pneg %p87
        %p162 = pneg %p84
        %p163 = scmp.lt.s32.totalorder %s19, 2
        %s164 = scalar_select %p163, %s19, 2
        %s165 = scalar_lea.vmem %s3, %s164
        %p167 = scmp.eq.s32.totalorder %s19, 2
        %p168 = scmp.eq.s32.totalorder %s19, 0
        // Predicated region
        $region33: #{tpu_custom_call.1} parent=27 // pred_check
          %p169 = pneg %p168
        $region34: #{tpu_custom_call.1} parent=27 // pred_check_branch
          %171 = sbr.rel (%p169) target = $region36
        $region35: #{tpu_custom_call.1} parent=27 // pred_region
          // Predicated region
          $region37: #{tpu_custom_call.1} parent=35 // pred_check
            _
          $region38: #{tpu_custom_call.1} parent=35 // pred_check_branch
            %173 = sbr.rel target = $region40
          $region39: #{tpu_custom_call.1} parent=35 // pred_region
            %174 = sst [smem:[#allocation11]] [#allocation10]
            %175 = sst [smem:[#allocation12]] [#allocation9]
          $region40: #{tpu_custom_call.1} parent=35 // pred_fallthru
            _
          %177 = shalt.err (0)
          %s179 = sshll.u32 [#allocation2], 4
          %s180 = int_to_ptr.vmem [resolvable:$true] %s179
          %182 = dma.hbm_to_vmem [thread:$0]  %s0, 1024, %s180, [#allocation4]
          %s183 = scalar_lea.sflag [#allocation4], 1
          // Predicated region
          $region41: #{tpu_custom_call.1} parent=35 // pred_check
            _
          $region42: #{tpu_custom_call.1} parent=35 // pred_check_branch
            %185 = sbr.rel target = $region44
          $region43: #{tpu_custom_call.1} parent=35 // pred_region
            %186 = sst [smem:[#allocation11]] [#allocation14]
            %187 = sst [smem:[#allocation12]] [#allocation13]
          $region44: #{tpu_custom_call.1} parent=35 // pred_fallthru
            _
          %189 = shalt.err (0)
          %s191 = sshll.u32 [#allocation3], 4
          %s192 = int_to_ptr.vmem [resolvable:$true] %s191
          %194 = dma.hbm_to_vmem [thread:$0]  %s1, 1024, %s192, %s183
          %s195 = smul.u32 4, 16
          %s196 = smul.u32 %s195, 1
          %s197 = sshll.u32 %s196, 4
          %198 = dma.done %s183, %s197
        $region36: #{tpu_custom_call.1} parent=27 // pred_fallthru
          _
        %v199 = vld [vmem:[#allocation3] sm:$0xff]
        %v200 = vld [vmem:[#allocation3 + $0x8] sm:$0xff]
        %v201 = vld [vmem:[#allocation3 + $0x10] sm:$0xff]
        %v202 = vld [vmem:[#allocation3 + $0x18] sm:$0xff]
        %v203 = vld [vmem:[#allocation3 + $0x20] sm:$0xff]
        %v204 = vld [vmem:[#allocation3 + $0x28] sm:$0xff]
        %v205 = vld [vmem:[#allocation3 + $0x30] sm:$0xff]
        %v206 = vld [vmem:[#allocation3 + $0x38] sm:$0xff]
        %v207 = vld [vmem:[%s144] sm:$0xf]
        %v208 = vld [vmem:[%s144 + $0x4] sm:$0xf]
        %v209 = vld [vmem:[%s144 + $0x8] sm:$0xf]
        %v210 = vld [vmem:[%s144 + $0xc] sm:$0xf]
        %v211 = vld [vmem:[%s144 + $0x10] sm:$0xf]
        %v212 = vld [vmem:[%s144 + $0x14] sm:$0xf]
        %v213 = vld [vmem:[%s144 + $0x18] sm:$0xf]
        %v214 = vld [vmem:[%s144 + $0x1c] sm:$0xf]
        %v215 = vld [vmem:[%s144 + $0x20] sm:$0xf]
        %v216 = vld [vmem:[%s144 + $0x24] sm:$0xf]
        %v217 = vld [vmem:[%s144 + $0x28] sm:$0xf]
        %v218 = vld [vmem:[%s144 + $0x2c] sm:$0xf]
        %v219 = vld [vmem:[%s144 + $0x30] sm:$0xf]
        %v220 = vld [vmem:[%s144 + $0x34] sm:$0xf]
        %v221 = vld [vmem:[%s144 + $0x38] sm:$0xf]
        %v222 = vld [vmem:[%s144 + $0x3c] sm:$0xf]
        %v239 = vunpack.c.l.b16 %v207
        %v240 = vunpack.c.l.b16 %v208
        %v241 = vunpack.c.l.b16 %v209
        %v242 = vunpack.c.l.b16 %v210
        %v243 = vunpack.c.l.b16 %v211
        %v244 = vunpack.c.l.b16 %v212
        %v245 = vunpack.c.l.b16 %v213
        %v246 = vunpack.c.l.b16 %v214
        %v247 = vunpack.c.l.b16 %v215
        %v248 = vunpack.c.l.b16 %v216
        %v249 = vunpack.c.l.b16 %v217
        %v250 = vunpack.c.l.b16 %v218
        %v251 = vunpack.c.l.b16 %v219
        %v252 = vunpack.c.l.b16 %v220
        %v253 = vunpack.c.l.b16 %v221
        %v254 = vunpack.c.l.b16 %v222
        %v255 = vpack.c.b16 %v240, %v239
        %v256 = vpack.c.b16 %v242, %v241
        %v257 = vpack.c.b16 %v244, %v243
        %v258 = vpack.c.b16 %v246, %v245
        %v259 = vpack.c.b16 %v248, %v247
        %v260 = vpack.c.b16 %v250, %v249
        %v261 = vpack.c.b16 %v252, %v251
        %v262 = vpack.c.b16 %v254, %v253
        %271 = vmatprep.subr.bf16.mxu0 0
        %272 = vmatpush1.bf16.msra.mxu0 %v255
        %273 = vmatprep.subr.bf16.mxu0 0
        %274 = vmatpush1.bf16.msra.mxu0 %v256
        %275 = vmatprep.subr.bf16.mxu0 0
        %276 = vmatpush1.bf16.msra.mxu0 %v257
        %277 = vmatprep.subr.bf16.mxu0 0
        %278 = vmatpush1.bf16.msra.mxu0 %v258
        %279 = vmatprep.subr.bf16.mxu0 0
        %280 = vmatpush1.bf16.msra.mxu0 %v259
        %281 = vmatprep.subr.bf16.mxu0 0
        %282 = vmatpush1.bf16.msra.mxu0 %v260
        %283 = vmatprep.subr.bf16.mxu0 0
        %284 = vmatpush1.bf16.msra.mxu0 %v261
        %285 = vmatprep.subr.bf16.mxu0 0
        %286 = vmatpush1.bf16.msra.mxu0 %v262
        %287 = vmatprep.subr.bf16.mxu0 0
        %288 = vmatpush1.bf16.msra.mxu0 0
        %289 = vmatprep.subr.bf16.mxu0 0
        %290 = vmatpush1.bf16.msra.mxu0 0
        %291 = vmatprep.subr.bf16.mxu0 0
        %292 = vmatpush1.bf16.msra.mxu0 0
        %293 = vmatprep.subr.bf16.mxu0 0
        %294 = vmatpush1.bf16.msra.mxu0 0
        %295 = vmatprep.subr.bf16.mxu0 0
        %296 = vmatpush1.bf16.msra.mxu0 0
        %297 = vmatprep.subr.bf16.mxu0 0
        %298 = vmatpush1.bf16.msra.mxu0 0
        %299 = vmatprep.subr.bf16.mxu0 0
        %300 = vmatpush1.bf16.msra.mxu0 0
        %301 = vmatprep.subr.bf16.mxu0 0
        %302 = vmatpush1.bf16.msra.mxu0 0
        %303 = vmatprep.mubr.bf16.mxu0 0
        %304 = vmatmul.mubr.bf16.gmra.mrb[0].mxu0 %v199
        %v305 = vpop.f32.mrb[0].mxu0
        %v306 = vadd.f32 0.0, %v305
        %v307 = vpop.f32.mrb[0].mxu0
        %v308 = vpop.f32.mrb[0].mxu0
        %v309 = vadd.f32 0.0, %v308
        %v310 = vpop.f32.mrb[0].mxu0
        %311 = vmatprep.mubr.bf16.mxu0 0
        %312 = vmatmul.mubr.bf16.gmra.mrb[0].mxu0 %v200
        %v313 = vpop.f32.mrb[0].mxu0
        %v314 = vadd.f32 0.0, %v313
        %v315 = vpop.f32.mrb[0].mxu0
        %v316 = vpop.f32.mrb[0].mxu0
        %v317 = vadd.f32 0.0, %v316
        %v318 = vpop.f32.mrb[0].mxu0
        %319 = vmatprep.mubr.bf16.mxu0 0
        %320 = vmatmul.mubr.bf16.gmra.mrb[0].mxu0 %v201
        %v321 = vpop.f32.mrb[0].mxu0
        %v322 = vadd.f32 0.0, %v321
        %v323 = vpop.f32.mrb[0].mxu0
        %v324 = vpop.f32.mrb[0].mxu0
        %v325 = vadd.f32 0.0, %v324
        %v326 = vpop.f32.mrb[0].mxu0
        %327 = vmatprep.mubr.bf16.mxu0 0
        %328 = vmatmul.mubr.bf16.gmra.mrb[0].mxu0 %v202
        %v329 = vpop.f32.mrb[0].mxu0
        %v330 = vadd.f32 0.0, %v329
        %v331 = vpop.f32.mrb[0].mxu0
        %v332 = vpop.f32.mrb[0].mxu0
        %v333 = vadd.f32 0.0, %v332
        %v334 = vpop.f32.mrb[0].mxu0
        %335 = vmatprep.mubr.bf16.mxu0 0
        %336 = vmatmul.mubr.bf16.gmra.mrb[0].mxu0 %v203
        %v337 = vpop.f32.mrb[0].mxu0
        %v338 = vadd.f32 0.0, %v337
        %v339 = vpop.f32.mrb[0].mxu0
        %v340 = vpop.f32.mrb[0].mxu0
        %v341 = vadd.f32 0.0, %v340
        %v342 = vpop.f32.mrb[0].mxu0
        %343 = vmatprep.mubr.bf16.mxu0 0
        %344 = vmatmul.mubr.bf16.gmra.mrb[0].mxu0 %v204
        %v345 = vpop.f32.mrb[0].mxu0
        %v346 = vadd.f32 0.0, %v345
        %v347 = vpop.f32.mrb[0].mxu0
        %v348 = vpop.f32.mrb[0].mxu0
        %v349 = vadd.f32 0.0, %v348
        %v350 = vpop.f32.mrb[0].mxu0
        %351 = vmatprep.mubr.bf16.mxu0 0
        %352 = vmatmul.mubr.bf16.gmra.mrb[0].mxu0 %v205
        %v353 = vpop.f32.mrb[0].mxu0
        %v354 = vadd.f32 0.0, %v353
        %v355 = vpop.f32.mrb[0].mxu0
        %v356 = vpop.f32.mrb[0].mxu0
        %v357 = vadd.f32 0.0, %v356
        %v358 = vpop.f32.mrb[0].mxu0
        %359 = vmatprep.mubr.bf16.mxu0 0
        %360 = vmatmul.mubr.bf16.gmra.mrb[0].mxu0 %v206
        %v361 = vpop.f32.mrb[0].mxu0
        %v362 = vadd.f32 0.0, %v361
        %v363 = vpop.f32.mrb[0].mxu0
        %v364 = vpop.f32.mrb[0].mxu0
        %v365 = vadd.f32 0.0, %v364
        %v366 = vpop.f32.mrb[0].mxu0
        %367 = vdwg.mxu0
        // Predicated region
        $region45: #{tpu_custom_call.1} parent=27 // pred_check
          %p368 = pneg %p168
        $region46: #{tpu_custom_call.1} parent=27 // pred_check_branch
          %370 = sbr.rel (%p368) target = $region48
        $region47: #{tpu_custom_call.1} parent=27 // pred_region
          %s371 = smul.u32 4, 16
          %s372 = smul.u32 %s371, 1
          %s373 = sshll.u32 %s372, 4
          %374 = dma.done [#allocation4], %s373
        $region48: #{tpu_custom_call.1} parent=27 // pred_fallthru
          _
        %v375 = vld [vmem:[#allocation2] sm:$0xff]
        %v376 = vld [vmem:[#allocation2 + $0x8] sm:$0xff]
        %v377 = vld [vmem:[#allocation2 + $0x10] sm:$0xff]
        %v378 = vld [vmem:[#allocation2 + $0x18] sm:$0xff]
        %v379 = vld [vmem:[#allocation2 + $0x20] sm:$0xff]
        %v380 = vld [vmem:[#allocation2 + $0x28] sm:$0xff]
        %v381 = vld [vmem:[#allocation2 + $0x30] sm:$0xff]
        %v382 = vld [vmem:[#allocation2 + $0x38] sm:$0xff]
        %v383 = vpack.c.bf16 %v309, %v306
        %v384 = vpack.c.bf16 %v317, %v314
        %v385 = vpack.c.bf16 %v325, %v322
        %v386 = vpack.c.bf16 %v333, %v330
        %v387 = vpack.c.bf16 %v341, %v338
        %v388 = vpack.c.bf16 %v349, %v346
        %v389 = vpack.c.bf16 %v357, %v354
        %v390 = vpack.c.bf16 %v365, %v362
        %v391 = vld [vmem:[%s165] sm:$0x1]
        %v393 = vlaneseq
        %v394 = vshrl.u32 %v393, 7
        %v395 = vsub.s32 0, %v394
        %v396 = vrot.slane %v391, %v395
        %398 = vmatprep.subr.bf16.mxu0 0
        %399 = vmatpush1.bf16.msra.mxu0 %v383
        %400 = vmatprep.subr.bf16.mxu0 0
        %401 = vmatpush1.bf16.msra.mxu0 %v384
        %402 = vmatprep.subr.bf16.mxu0 0
        %403 = vmatpush1.bf16.msra.mxu0 %v385
        %404 = vmatprep.subr.bf16.mxu0 0
        %405 = vmatpush1.bf16.msra.mxu0 %v386
        %406 = vmatprep.subr.bf16.mxu0 0
        %407 = vmatpush1.bf16.msra.mxu0 %v387
        %408 = vmatprep.subr.bf16.mxu0 0
        %409 = vmatpush1.bf16.msra.mxu0 %v388
        %410 = vmatprep.subr.bf16.mxu0 0
        %411 = vmatpush1.bf16.msra.mxu0 %v389
        %412 = vmatprep.subr.bf16.mxu0 0
        %413 = vmatpush1.bf16.msra.mxu0 %v390
        %414 = vmatprep.subr.bf16.mxu0 0
        %415 = vmatpush1.bf16.msra.mxu0 0
        %416 = vmatprep.subr.bf16.mxu0 0
        %417 = vmatpush1.bf16.msra.mxu0 0
        %418 = vmatprep.subr.bf16.mxu0 0
        %419 = vmatpush1.bf16.msra.mxu0 0
        %420 = vmatprep.subr.bf16.mxu0 0
        %421 = vmatpush1.bf16.msra.mxu0 0
        %422 = vmatprep.subr.bf16.mxu0 0
        %423 = vmatpush1.bf16.msra.mxu0 0
        %424 = vmatprep.subr.bf16.mxu0 0
        %425 = vmatpush1.bf16.msra.mxu0 0
        %426 = vmatprep.subr.bf16.mxu0 0
        %427 = vmatpush1.bf16.msra.mxu0 0
        %428 = vmatprep.subr.bf16.mxu0 0
        %429 = vmatpush1.bf16.msra.mxu0 0
        %430 = vmatprep.mubr.bf16.mxu0 0
        %431 = vmatmul.mubr.bf16.gmra.mrb[0].mxu0 %v375
        %v432 = vpop.f32.mrb[0].mxu0
        %v433 = vadd.f32 %v396, %v432
        %v434 = vpop.f32.mrb[0].mxu0
        %v435 = vpop.f32.mrb[0].mxu0
        %v436 = vadd.f32 %v396, %v435
        %v437 = vpop.f32.mrb[0].mxu0
        %438 = vmatprep.mubr.bf16.mxu0 0
        %439 = vmatmul.mubr.bf16.gmra.mrb[0].mxu0 %v376
        %v440 = vpop.f32.mrb[0].mxu0
        %v441 = vadd.f32 %v396, %v440
        %v442 = vpop.f32.mrb[0].mxu0
        %v443 = vpop.f32.mrb[0].mxu0
        %v444 = vadd.f32 %v396, %v443
        %v445 = vpop.f32.mrb[0].mxu0
        %446 = vmatprep.mubr.bf16.mxu0 0
        %447 = vmatmul.mubr.bf16.gmra.mrb[0].mxu0 %v377
        %v448 = vpop.f32.mrb[0].mxu0
        %v449 = vadd.f32 %v396, %v448
        %v450 = vpop.f32.mrb[0].mxu0
        %v451 = vpop.f32.mrb[0].mxu0
        %v452 = vadd.f32 %v396, %v451
        %v453 = vpop.f32.mrb[0].mxu0
        %454 = vmatprep.mubr.bf16.mxu0 0
        %455 = vmatmul.mubr.bf16.gmra.mrb[0].mxu0 %v378
        %v456 = vpop.f32.mrb[0].mxu0
        %v457 = vadd.f32 %v396, %v456
        %v458 = vpop.f32.mrb[0].mxu0
        %v459 = vpop.f32.mrb[0].mxu0
        %v460 = vadd.f32 %v396, %v459
        %v461 = vpop.f32.mrb[0].mxu0
        %462 = vmatprep.mubr.bf16.mxu0 0
        %463 = vmatmul.mubr.bf16.gmra.mrb[0].mxu0 %v379
        %v464 = vpop.f32.mrb[0].mxu0
        %v465 = vadd.f32 %v396, %v464
        %v466 = vpop.f32.mrb[0].mxu0
        %v467 = vpop.f32.mrb[0].mxu0
        %v468 = vadd.f32 %v396, %v467
        %v469 = vpop.f32.mrb[0].mxu0
        %470 = vmatprep.mubr.bf16.mxu0 0
        %471 = vmatmul.mubr.bf16.gmra.mrb[0].mxu0 %v380
        %v472 = vpop.f32.mrb[0].mxu0
        %v473 = vadd.f32 %v396, %v472
        %v474 = vpop.f32.mrb[0].mxu0
        %v475 = vpop.f32.mrb[0].mxu0
        %v476 = vadd.f32 %v396, %v475
        %v477 = vpop.f32.mrb[0].mxu0
        %478 = vmatprep.mubr.bf16.mxu0 0
        %479 = vmatmul.mubr.bf16.gmra.mrb[0].mxu0 %v381
        %v480 = vpop.f32.mrb[0].mxu0
        %v481 = vadd.f32 %v396, %v480
        %v482 = vpop.f32.mrb[0].mxu0
        %v483 = vpop.f32.mrb[0].mxu0
        %v484 = vadd.f32 %v396, %v483
        %v485 = vpop.f32.mrb[0].mxu0
        %486 = vmatprep.mubr.bf16.mxu0 0
        %487 = vmatmul.mubr.bf16.gmra.mrb[0].mxu0 %v382
        %v488 = vpop.f32.mrb[0].mxu0
        %v489 = vadd.f32 %v396, %v488
        %v490 = vpop.f32.mrb[0].mxu0
        %v491 = vpop.f32.mrb[0].mxu0
        %v492 = vadd.f32 %v396, %v491
        %v493 = vpop.f32.mrb[0].mxu0
        %494 = vdwg.mxu0
        %p495 = scmp.lt.s32.totalorder %s19, 2
        // Predicated region
        $region49: #{tpu_custom_call.1} parent=27 // pred_check
          %p496 = pneg %p495
        $region50: #{tpu_custom_call.1} parent=27 // pred_check_branch
          %498 = sbr.rel (%p496) target = $region52
        $region51: #{tpu_custom_call.1} parent=27 // pred_region
          %v499 = vmax.f32 %v433, 0.0
          %v500 = vmax.f32 %v436, 0.0
          %v501 = vmax.f32 %v441, 0.0
          %v502 = vmax.f32 %v444, 0.0
          %v503 = vmax.f32 %v449, 0.0
          %v504 = vmax.f32 %v452, 0.0
          %v505 = vmax.f32 %v457, 0.0
          %v506 = vmax.f32 %v460, 0.0
          %v507 = vmax.f32 %v465, 0.0
          %v508 = vmax.f32 %v468, 0.0
          %v509 = vmax.f32 %v473, 0.0
          %v510 = vmax.f32 %v476, 0.0
          %v511 = vmax.f32 %v481, 0.0
          %v512 = vmax.f32 %v484, 0.0
          %v513 = vmax.f32 %v489, 0.0
          %v514 = vmax.f32 %v492, 0.0
          %v515 = vpack.c.bf16 %v500, %v499
          %v516 = vpack.c.bf16 %v502, %v501
          %v517 = vpack.c.bf16 %v504, %v503
          %v518 = vpack.c.bf16 %v506, %v505
          %v519 = vpack.c.bf16 %v508, %v507
          %v520 = vpack.c.bf16 %v510, %v509
          %v521 = vpack.c.bf16 %v512, %v511
          %v522 = vpack.c.bf16 %v514, %v513
          %523 = vst [vmem:[#allocation3] sm:$0xff] %v515
          %524 = vst [vmem:[#allocation3 + $0x8] sm:$0xff] %v516
          %525 = vst [vmem:[#allocation3 + $0x10] sm:$0xff] %v517
          %526 = vst [vmem:[#allocation3 + $0x18] sm:$0xff] %v518
          %527 = vst [vmem:[#allocation3 + $0x20] sm:$0xff] %v519
          %528 = vst [vmem:[#allocation3 + $0x28] sm:$0xff] %v520
          %529 = vst [vmem:[#allocation3 + $0x30] sm:$0xff] %v521
          %530 = vst [vmem:[#allocation3 + $0x38] sm:$0xff] %v522
        $region52: #{tpu_custom_call.1} parent=27 // pred_fallthru
          _
        // Predicated region
        $region53: #{tpu_custom_call.1} parent=27 // pred_check
          %p531 = pneg %p167
        $region54: #{tpu_custom_call.1} parent=27 // pred_check_branch
          %533 = sbr.rel (%p531) target = $region56
        $region55: #{tpu_custom_call.1} parent=27 // pred_region
          %534 = vst [vmem:[#allocation8] sm:$0xff] %v433
          %535 = vst [vmem:[#allocation8 + $0x8] sm:$0xff] %v436
          %536 = vst [vmem:[#allocation8 + $0x10] sm:$0xff] %v441
          %537 = vst [vmem:[#allocation8 + $0x18] sm:$0xff] %v444
          %538 = vst [vmem:[#allocation8 + $0x20] sm:$0xff] %v449
          %539 = vst [vmem:[#allocation8 + $0x28] sm:$0xff] %v452
          %540 = vst [vmem:[#allocation8 + $0x30] sm:$0xff] %v457
          %541 = vst [vmem:[#allocation8 + $0x38] sm:$0xff] %v460
          %542 = vst [vmem:[#allocation8 + $0x40] sm:$0xff] %v465
          %543 = vst [vmem:[#allocation8 + $0x48] sm:$0xff] %v468
          %544 = vst [vmem:[#allocation8 + $0x50] sm:$0xff] %v473
          %545 = vst [vmem:[#allocation8 + $0x58] sm:$0xff] %v476
          %546 = vst [vmem:[#allocation8 + $0x60] sm:$0xff] %v481
          %547 = vst [vmem:[#allocation8 + $0x68] sm:$0xff] %v484
          %548 = vst [vmem:[#allocation8 + $0x70] sm:$0xff] %v489
          %549 = vst [vmem:[#allocation8 + $0x78] sm:$0xff] %v492
        $region56: #{tpu_custom_call.1} parent=27 // pred_fallthru
          _
        // Predicated region
        $region57: #{tpu_custom_call.1} parent=27 // pred_check
          %p550 = pneg %p84
        $region58: #{tpu_custom_call.1} parent=27 // pred_check_branch
          %552 = sbr.rel (%p550) target = $region60
        $region59: #{tpu_custom_call.1} parent=27 // pred_region
          %s554 = ssub.s32 2048, 2048
          %555 = vsyncadd [#allocation7], %s554
          %s556 = sshll.u32 [#allocation8], 4
          %s557 = int_to_ptr.vmem [resolvable:$true] %s556
          %562 = dma.vmem_to_hbm [thread:$0]  %s557, 2048, %s4, [#allocation7], 128, 128, 8
        $region60: #{tpu_custom_call.1} parent=27 // pred_fallthru
          _
        // Predicated region
        $region61: #{tpu_custom_call.1} parent=27 // pred_check
          %p563 = pneg %p84
        $region62: #{tpu_custom_call.1} parent=27 // pred_check_branch
          %565 = sbr.rel (%p563) target = $region64
        $region63: #{tpu_custom_call.1} parent=27 // pred_region
          %566 = dma.done [#allocation7], 2048
        $region64: #{tpu_custom_call.1} parent=27 // pred_fallthru
          _
      $region28: #{tpu_custom_call.1} parent=5 // pred_fallthru
        _
      %p567 = scmp.le.s32.totalorder 2, %s14
      // Predicated region
      $region65: #{tpu_custom_call.1} parent=5 // pred_check
        %p568 = pneg %p567
      $region66: #{tpu_custom_call.1} parent=5 // pred_check_branch
        %570 = sbr.rel (%p568) target = $region68
      $region67: #{tpu_custom_call.1} parent=5 // pred_region
        %s571 = ssub.s32 %s14, 2
      $region68: #{tpu_custom_call.1} parent=5 // pred_fallthru
        _
    $region6: #{tpu_custom_call.1} parent=1 // loop_footer
      %s18 = sadd.s32 1, %s14
    $region7: #{tpu_custom_call.1} parent=1 // loop_footer_branch
      %13 = sbr.rel target = $region3
    $region8: #{tpu_custom_call.1} parent=1 // loop_exit
      _
    %572 = vsyncpa [#allocation6], 1
    %s573 = scalar_lea.sflag [#allocation6], 1
    %574 = vsyncpa %s573, 1
    %575 = vsyncpa [#allocation7], 1
    %s576 = scalar_lea.sflag [#allocation7], 1
    %577 = vsyncpa %s576, 1
  %578 = vsyncmov [#allocation4]
  %s579 = vpop.sfrf %578
  %p580 = scmp.eq.s32.totalorder %s579, 0
  %p581 = pneg %p580
  %583 = shalt.err (%p581)
  %s584 = scalar_lea.sflag [#allocation4], 1
  %585 = vsyncmov %s584
  %s586 = vpop.sfrf %585
  %p587 = scmp.eq.s32.totalorder %s586, 0
  %p588 = pneg %p587
  %590 = shalt.err (%p588)

</llo_original>
